<compile_context>
chip_gen: v7x
topology: tpu7x:2x2x1
jax: 0.10.0
libtpu: 0.0.40
codegen_flags: <defaults>
</compile_context>

<pallas_src>
import functools

import jax
import jax.numpy as jnp
from jax.experimental import pallas as pl
from jax.experimental.pallas import tpu as pltpu

_LANE = 128  # lane-dense logits width (TPU vreg lane count)


def _mlp_kernel(x_ref, w1_ref, b1_ref, w2_ref, b2_ref, o_ref):
    # x_ref:  (TB, OBS)   f32
    # w1_ref: (OBS, HID)  f32
    # b1_ref: (1, HID)    f32
    # w2_ref: (HID, 128)  f32  (zero-padded past n_actions)
    # b2_ref: (1, 128)    f32  (zero-padded past n_actions)
    # o_ref:  (TB, 128)   f32  (lane-dense logits slab)
    x = x_ref[...]
    w1 = w1_ref[...]
    tb = x.shape[0]
    hid = w1.shape[1]

    # ---- Layer 1 on the VPU: unrolled broadcast-FMA over the tiny K=OBS axis.
    h = jnp.broadcast_to(b1_ref[...], (tb, hid))
    for k in range(w1.shape[0]):              # static unroll (obs_size is tiny)
        h = h + x[:, k:k + 1] * w1[k:k + 1, :]
    h = jnp.maximum(h, 0.0)                   # ReLU

    # ---- Layer 2 on the MXU: (TB, HID) @ (HID, 128) -> lane-dense output.
    out = jnp.dot(h, w2_ref[...], preferred_element_type=jnp.float32)
    o_ref[...] = (out + b2_ref[...]).astype(o_ref.dtype)


@functools.partial(jax.jit, static_argnames=("block_b",))
def neural_net_forward(obs, w1, b1, w2, b2, *, block_b=512):
    """obs: (B, obs_size) f32; w1: (obs_size, H); b1: (H,); w2: (H, A); b2: (A,).

    Returns (B, A) logits, identical math to the PyTorch module:
        relu(obs @ W1 + b1) @ W2 + b2
    """
    B, obs_size = obs.shape
    hid, n_actions = w2.shape
    assert n_actions <= _LANE, "n_actions must fit in one lane-dense slab"

    # Batch tile: cap at block_b, shrink to the (sublane-aligned) batch for
    # small batches so we never compute a mostly-padded tile.
    tb = min(block_b, max(8, ((B + 7) // 8) * 8))
    n_blocks = pl.cdiv(B, tb)
    B_pad = n_blocks * tb
    if B_pad != B:
        obs = jnp.pad(obs, ((0, B_pad - B), (0, 0)))

    # Zero-pad the action dimension to 128 lanes so the output store is a full,
    # unmasked vreg store.  Padded lanes read zero weights + zero bias.
    w2p = jnp.zeros((hid, _LANE), w2.dtype).at[:, :n_actions].set(w2)
    b2p = jnp.zeros((1, _LANE), b2.dtype).at[:, :n_actions].set(b2)
    b1r = b1.reshape(1, -1)

    out_padded = pl.pallas_call(
        _mlp_kernel,
        out_shape=jax.ShapeDtypeStruct((B_pad, _LANE), jnp.float32),
        grid=(n_blocks,),
        in_specs=[
            pl.BlockSpec((tb, obs_size), lambda i: (i, 0)),   # batch-tiled obs
            pl.BlockSpec(w1.shape, lambda i: (0, 0)),         # resident weights
            pl.BlockSpec(b1r.shape, lambda i: (0, 0)),
            pl.BlockSpec(w2p.shape, lambda i: (0, 0)),
            pl.BlockSpec(b2p.shape, lambda i: (0, 0)),
        ],
        out_specs=pl.BlockSpec((tb, _LANE), lambda i: (i, 0)),
        compiler_params=pltpu.CompilerParams(
            dimension_semantics=("parallel",)),  # independent batch tiles
    )(obs, w1, b1r, w2p, b2p)

    # Slice back to the real batch / action count (fuses under jit).
    return out_padded[:B, :n_actions]


def init_params(key, obs_size, hidden_size, n_actions):
    """Deterministic init mimicking PyTorch nn.Linear default (uniform +-1/sqrt(fan_in))."""
    k1, k2, k3, k4 = jax.random.split(key, 4)
    bound1 = 1.0 / jnp.sqrt(obs_size)
    bound2 = 1.0 / jnp.sqrt(hidden_size)
    w1 = jax.random.uniform(k1, (obs_size, hidden_size), jnp.float32, -bound1, bound1)
    b1 = jax.random.uniform(k2, (hidden_size,), jnp.float32, -bound1, bound1)
    w2 = jax.random.uniform(k3, (hidden_size, n_actions), jnp.float32, -bound2, bound2)
    b2 = jax.random.uniform(k4, (n_actions,), jnp.float32, -bound2, bound2)
    return w1, b1, w2, b2


if __name__ == "__main__":
    # CartPole sizes: obs_size=4, hidden=32, n_actions=2, rollout-style batch.
    OBS, HID, ACT, BATCH = 4, 32, 2, 256

    key = jax.random.PRNGKey(0)
    k_obs, k_params = jax.random.split(key)
    obs = jax.random.normal(k_obs, (BATCH, OBS), jnp.float32)
    w1, b1, w2, b2 = init_params(k_params, OBS, HID, ACT)

    out = jax.block_until_ready(
        neural_net_forward(obs, w1, b1, w2, b2, block_b=128))

    # Reference check in plain JAX (same math as the PyTorch module).
    ref = jnp.maximum(obs @ w1 + b1, 0.0) @ w2 + b2
    assert out.shape == (BATCH, ACT)
    assert jnp.allclose(out, ref, atol=1e-5, rtol=1e-5), "mismatch vs reference"

    # Also exercise a ragged batch (tile-shrink + padding path).
    out_small = jax.block_until_ready(
        neural_net_forward(obs[:37], w1, b1, w2, b2, block_b=128))
    assert out_small.shape == (37, ACT)
    assert jnp.allclose(out_small, ref[:37], atol=1e-5, rtol=1e-5)

    print("KERNEL_OK")
</pallas_src>

<mosaic_0001>
module attributes {stable_mosaic.version = 11 : i64} {
  func.func @_mlp_kernel(%arg0: i32, %arg1: memref<128x4xf32, #tpu.memory_space<vmem>>, %arg2: memref<4x32xf32, #tpu.memory_space<vmem>>, %arg3: memref<1x32xf32, #tpu.memory_space<vmem>>, %arg4: memref<32x128xf32, #tpu.memory_space<vmem>>, %arg5: memref<1x128xf32, #tpu.memory_space<vmem>>, %arg6: memref<128x128xf32, #tpu.memory_space<vmem>>) attributes {dimension_semantics = [#tpu.dimension_semantics<parallel>], iteration_bounds = array<i64: 2>, scalar_prefetch = 0 : i64, scratch_operands = 0 : i64, tpu.core_type = #tpu.core_type<tc>, window_params = [{transform_indices = @transform_0, window_bounds = array<i64: 128, 4>}, {pipeline_mode = #tpu.pipeline_mode<synchronous>, transform_indices = @transform_1, window_bounds = array<i64: 4, 32>}, {pipeline_mode = #tpu.pipeline_mode<synchronous>, transform_indices = @transform_2, window_bounds = array<i64: 1, 32>}, {pipeline_mode = #tpu.pipeline_mode<synchronous>, transform_indices = @transform_3, window_bounds = array<i64: 32, 128>}, {pipeline_mode = #tpu.pipeline_mode<synchronous>, transform_indices = @transform_4, window_bounds = array<i64: 1, 128>}, {transform_indices = @transform_5, window_bounds = array<i64: 128, 128>}]} {
    %c0 = arith.constant 0 : index
    %c0_0 = arith.constant 0 : index
    %0 = vector.load %arg1[%c0, %c0_0] : memref<128x4xf32, #tpu.memory_space<vmem>>, vector<128x4xf32>
    %c0_1 = arith.constant 0 : index
    %c0_2 = arith.constant 0 : index
    %1 = vector.load %arg2[%c0_1, %c0_2] : memref<4x32xf32, #tpu.memory_space<vmem>>, vector<4x32xf32>
    %c0_3 = arith.constant 0 : index
    %c0_4 = arith.constant 0 : index
    %2 = vector.load %arg3[%c0_3, %c0_4] : memref<1x32xf32, #tpu.memory_space<vmem>>, vector<1x32xf32>
    %3 = vector.shape_cast %2 : vector<1x32xf32> to vector<1x32xf32>
    %4 = vector.broadcast %3 : vector<1x32xf32> to vector<128x32xf32>
    %5 = vector.extract_strided_slice %0 {offsets = [0, 0], sizes = [128, 1], strides = [1, 1]} : vector<128x4xf32> to vector<128x1xf32>
    %6 = vector.extract_strided_slice %1 {offsets = [0, 0], sizes = [1, 32], strides = [1, 1]} : vector<4x32xf32> to vector<1x32xf32>
    %7 = vector.broadcast %5 : vector<128x1xf32> to vector<128x32xf32>
    %8 = vector.broadcast %6 : vector<1x32xf32> to vector<128x32xf32>
    %9 = arith.mulf %7, %8 : vector<128x32xf32>
    %10 = arith.addf %4, %9 : vector<128x32xf32>
    %11 = vector.extract_strided_slice %0 {offsets = [0, 1], sizes = [128, 1], strides = [1, 1]} : vector<128x4xf32> to vector<128x1xf32>
    %12 = vector.extract_strided_slice %1 {offsets = [1, 0], sizes = [1, 32], strides = [1, 1]} : vector<4x32xf32> to vector<1x32xf32>
    %13 = vector.broadcast %11 : vector<128x1xf32> to vector<128x32xf32>
    %14 = vector.broadcast %12 : vector<1x32xf32> to vector<128x32xf32>
    %15 = arith.mulf %13, %14 : vector<128x32xf32>
    %16 = arith.addf %10, %15 : vector<128x32xf32>
    %17 = vector.extract_strided_slice %0 {offsets = [0, 2], sizes = [128, 1], strides = [1, 1]} : vector<128x4xf32> to vector<128x1xf32>
    %18 = vector.extract_strided_slice %1 {offsets = [2, 0], sizes = [1, 32], strides = [1, 1]} : vector<4x32xf32> to vector<1x32xf32>
    %19 = vector.broadcast %17 : vector<128x1xf32> to vector<128x32xf32>
    %20 = vector.broadcast %18 : vector<1x32xf32> to vector<128x32xf32>
    %21 = arith.mulf %19, %20 : vector<128x32xf32>
    %22 = arith.addf %16, %21 : vector<128x32xf32>
    %23 = vector.extract_strided_slice %0 {offsets = [0, 3], sizes = [128, 1], strides = [1, 1]} : vector<128x4xf32> to vector<128x1xf32>
    %24 = vector.extract_strided_slice %1 {offsets = [3, 0], sizes = [1, 32], strides = [1, 1]} : vector<4x32xf32> to vector<1x32xf32>
    %25 = vector.broadcast %23 : vector<128x1xf32> to vector<128x32xf32>
    %26 = vector.broadcast %24 : vector<1x32xf32> to vector<128x32xf32>
    %27 = arith.mulf %25, %26 : vector<128x32xf32>
    %28 = arith.addf %22, %27 : vector<128x32xf32>
    %cst = arith.constant 0.000000e+00 : f32
    %29 = vector.broadcast %cst : f32 to vector<128x32xf32>
    %30 = arith.maximumf %28, %29 : vector<128x32xf32>
    %c0_5 = arith.constant 0 : index
    %c0_6 = arith.constant 0 : index
    %31 = vector.load %arg4[%c0_5, %c0_6] : memref<32x128xf32, #tpu.memory_space<vmem>>, vector<32x128xf32>
    %cst_7 = arith.constant dense<0.000000e+00> : vector<128x128xf32>
    %32 = tpu.matmul %30, %31, %cst_7 {dimension_numbers = #tpu.dot_dimension_numbers<[1], [0], [0], [1], [0, 0, 1, 1], [], []>} : vector<128x32xf32>, vector<32x128xf32>, vector<128x128xf32> -> vector<128x128xf32>
    %c0_8 = arith.constant 0 : index
    %c0_9 = arith.constant 0 : index
    %33 = vector.load %arg5[%c0_8, %c0_9] : memref<1x128xf32, #tpu.memory_space<vmem>>, vector<1x128xf32>
    %34 = vector.broadcast %33 : vector<1x128xf32> to vector<128x128xf32>
    %35 = arith.addf %32, %34 : vector<128x128xf32>
    %c0_10 = arith.constant 0 : index
    %c0_11 = arith.constant 0 : index
    %36 = vector.load %arg6[%c0_10, %c0_11] : memref<128x128xf32, #tpu.memory_space<vmem>>, vector<128x128xf32>
    tpu.vector_store %arg6[%c0_10, %c0_11], %35 {strides = array<i32>} : memref<128x128xf32, #tpu.memory_space<vmem>>, vector<128x128xf32>,
    return
  }
  func.func @transform_0(%arg0: i32) -> (i32, i32) {
    %c0_i32 = arith.constant 0 : i32
    %c0_i32_0 = arith.constant 0 : i32
    return %arg0, %c0_i32 : i32, i32
  }
  func.func @transform_1(%arg0: i32) -> (i32, i32) {
    %c0_i32 = arith.constant 0 : i32
    %c0_i32_0 = arith.constant 0 : i32
    %c0_i32_1 = arith.constant 0 : i32
    return %c0_i32, %c0_i32_0 : i32, i32
  }
  func.func @transform_2(%arg0: i32) -> (i32, i32) {
    %c0_i32 = arith.constant 0 : i32
    %c0_i32_0 = arith.constant 0 : i32
    %c0_i32_1 = arith.constant 0 : i32
    return %c0_i32, %c0_i32_0 : i32, i32
  }
  func.func @transform_3(%arg0: i32) -> (i32, i32) {
    %c0_i32 = arith.constant 0 : i32
    %c0_i32_0 = arith.constant 0 : i32
    %c0_i32_1 = arith.constant 0 : i32
    return %c0_i32, %c0_i32_0 : i32, i32
  }
  func.func @transform_4(%arg0: i32) -> (i32, i32) {
    %c0_i32 = arith.constant 0 : i32
    %c0_i32_0 = arith.constant 0 : i32
    %c0_i32_1 = arith.constant 0 : i32
    return %c0_i32, %c0_i32_0 : i32, i32
  }
  func.func @transform_5(%arg0: i32) -> (i32, i32) {
    %c0_i32 = arith.constant 0 : i32
    %c0_i32_0 = arith.constant 0 : i32
    return %arg0, %c0_i32 : i32, i32
  }
}

</mosaic_0001>

<llo_original>
// kernel: neural_net_forward.1
$region0: #{neural_net_forward.1}
  #allocation0 [shape = 'u32[]', space=smem, size = 0x4, offset = 0x4, fixed_abs, tag = 'smem constant byte address 0x4 - core index']
  #allocation1 [shape = 'u32[144,128]{1,0:T(1,128)}', space=vmem, size = 0x12000, scoped, tag = 'internal scratch']
  %s0 = inlined_call_operand.vmem [shape: f32[256,4], index: 0, kind: input, shape index: {}]
  %s1 = inlined_call_operand.vmem [shape: f32[4,32], index: 1, kind: input, shape index: {}]
  %s2 = inlined_call_operand.vmem [shape: f32[1,32], index: 2, kind: input, shape index: {}]
  %s3 = inlined_call_operand.vmem [shape: f32[32,128], index: 3, kind: input, shape index: {}]
  %s4 = inlined_call_operand.vmem [shape: f32[1,128], index: 4, kind: input, shape index: {}]
  %s5 = inlined_call_operand.vmem [shape: f32[256,128], index: 5, kind: output, shape index: {}]
  %s6 = sld [smem:[#allocation0]]
  $region53: #{neural_net_forward.1} parent=0
    _
  %s8 = ssub.s32 1, %s6
  %s9 = scalar_select 0, %s8, %s6
  loop: start=0, step=1, limit=4
  $region2: #{neural_net_forward.1} parent=0 // loop_pre_header
    _
  $region3: #{neural_net_forward.1} parent=0 // loop_header
    %s11 = sphi 0, %s15
    %p12 = scmp.ge.s32.totalorder %s11, 4
    %s21 = sphi 0, %s23
    %s24 = sphi 0, %s21
    %s25 = sphi 0, %s24
    %s41 = sphi 0, %s25
    %s45 = sphi 0, %s45
    %s47 = sphi 0, %s45
    %s48 = sphi 0, %s47
    %s62 = sphi 0, %s48
    %s66 = sphi 0, %s66
    %s68 = sphi 0, %s66
    %s69 = sphi 0, %s68
    %s83 = sphi 0, %s69
    %s87 = sphi 0, %s87
    %s89 = sphi 0, %s87
    %s90 = sphi 0, %s89
    %s104 = sphi 0, %s90
    %s108 = sphi 0, %s108
    %s110 = sphi 0, %s108
    %s111 = sphi 0, %s110
    %s125 = sphi 0, %s111
    %s131 = sphi 0, %s133
    %s134 = sphi 0, %s131
    %s135 = sphi 0, %s134
    %s151 = sphi 0, %s135
  $region4: #{neural_net_forward.1} parent=0 // loop_header_branch
    %14 = sbr.rel (%p12) target = $region8
  $region5: #{neural_net_forward.1} parent=0 // loop_body
    %s16 = ssub.s32 %s11, 1
    %s17 = ssub.s32 %s11, 2
    %s18 = sadd.s32 %s11, 1
    %s19 = ssub.s32 %s11, %s18
    %p20 = scmp.eq.s32.totalorder %s19, 0
    %s22 = sadd.s32 %s21, 1
    %s23 = scalar_select %p20, %s21, %s22
    %p26 = pneg %p20
    %p27 = scmp.eq.s32.totalorder %s11, 1
    %p28 = por %p26, %p27
    %p29 = scmp.ne.s32.totalorder %s21, %s24
    %p30 = scmp.eq.s32.totalorder %s11, 0
    %p31 = por %p29, %p30
    %p32 = scmp.ne.s32.totalorder %s21, %s24
    %p33 = scmp.eq.s32.totalorder %s16, 1
    %p34 = por %p32, %p33
    %p35 = scmp.ne.s32.totalorder %s24, %s25
    %p36 = scmp.eq.s32.totalorder %s16, 0
    %p37 = por %p35, %p36
    %p38 = scmp.ne.s32.totalorder %s24, %s25
    %p39 = scmp.eq.s32.totalorder %s17, 1
    %p40 = por %p38, %p39
    %p42 = scmp.ne.s32.totalorder %s25, %s41
    %p43 = scmp.eq.s32.totalorder %s17, 0
    %p44 = por %p42, %p43
    %s46 = sadd.s32 %s45, 1
    %p49 = scmp.eq.s32.totalorder %s11, 1
    %p50 = scmp.ne.s32.totalorder %s45, %s47
    %p51 = scmp.eq.s32.totalorder %s11, 0
    %p52 = por %p50, %p51
    %p53 = scmp.ne.s32.totalorder %s45, %s47
    %p54 = scmp.eq.s32.totalorder %s16, 1
    %p55 = por %p53, %p54
    %p56 = scmp.ne.s32.totalorder %s47, %s48
    %p57 = scmp.eq.s32.totalorder %s16, 0
    %p58 = por %p56, %p57
    %p59 = scmp.ne.s32.totalorder %s47, %s48
    %p60 = scmp.eq.s32.totalorder %s17, 1
    %p61 = por %p59, %p60
    %p63 = scmp.ne.s32.totalorder %s48, %s62
    %p64 = scmp.eq.s32.totalorder %s17, 0
    %p65 = por %p63, %p64
    %s67 = sadd.s32 %s66, 1
    %p70 = scmp.eq.s32.totalorder %s11, 1
    %p71 = scmp.ne.s32.totalorder %s66, %s68
    %p72 = scmp.eq.s32.totalorder %s11, 0
    %p73 = por %p71, %p72
    %p74 = scmp.ne.s32.totalorder %s66, %s68
    %p75 = scmp.eq.s32.totalorder %s16, 1
    %p76 = por %p74, %p75
    %p77 = scmp.ne.s32.totalorder %s68, %s69
    %p78 = scmp.eq.s32.totalorder %s16, 0
    %p79 = por %p77, %p78
    %p80 = scmp.ne.s32.totalorder %s68, %s69
    %p81 = scmp.eq.s32.totalorder %s17, 1
    %p82 = por %p80, %p81
    %p84 = scmp.ne.s32.totalorder %s69, %s83
    %p85 = scmp.eq.s32.totalorder %s17, 0
    %p86 = por %p84, %p85
    %s88 = sadd.s32 %s87, 1
    %p91 = scmp.eq.s32.totalorder %s11, 1
    %p92 = scmp.ne.s32.totalorder %s87, %s89
    %p93 = scmp.eq.s32.totalorder %s11, 0
    %p94 = por %p92, %p93
    %p95 = scmp.ne.s32.totalorder %s87, %s89
    %p96 = scmp.eq.s32.totalorder %s16, 1
    %p97 = por %p95, %p96
    %p98 = scmp.ne.s32.totalorder %s89, %s90
    %p99 = scmp.eq.s32.totalorder %s16, 0
    %p100 = por %p98, %p99
    %p101 = scmp.ne.s32.totalorder %s89, %s90
    %p102 = scmp.eq.s32.totalorder %s17, 1
    %p103 = por %p101, %p102
    %p105 = scmp.ne.s32.totalorder %s90, %s104
    %p106 = scmp.eq.s32.totalorder %s17, 0
    %p107 = por %p105, %p106
    %s109 = sadd.s32 %s108, 1
    %p112 = scmp.eq.s32.totalorder %s11, 1
    %p113 = scmp.ne.s32.totalorder %s108, %s110
    %p114 = scmp.eq.s32.totalorder %s11, 0
    %p115 = por %p113, %p114
    %p116 = scmp.ne.s32.totalorder %s108, %s110
    %p117 = scmp.eq.s32.totalorder %s16, 1
    %p118 = por %p116, %p117
    %p119 = scmp.ne.s32.totalorder %s110, %s111
    %p120 = scmp.eq.s32.totalorder %s16, 0
    %p121 = por %p119, %p120
    %p122 = scmp.ne.s32.totalorder %s110, %s111
    %p123 = scmp.eq.s32.totalorder %s17, 1
    %p124 = por %p122, %p123
    %p126 = scmp.ne.s32.totalorder %s111, %s125
    %p127 = scmp.eq.s32.totalorder %s17, 0
    %p128 = por %p126, %p127
    %s129 = ssub.s32 %s11, %s18
    %p130 = scmp.eq.s32.totalorder %s129, 0
    %s132 = sadd.s32 %s131, 1
    %s133 = scalar_select %p130, %s131, %s132
    %p136 = pneg %p130
    %p137 = scmp.eq.s32.totalorder %s11, 1
    %p138 = por %p136, %p137
    %p139 = scmp.ne.s32.totalorder %s131, %s134
    %p140 = scmp.eq.s32.totalorder %s11, 0
    %p141 = por %p139, %p140
    %p142 = scmp.ne.s32.totalorder %s131, %s134
    %p143 = scmp.eq.s32.totalorder %s16, 1
    %p144 = por %p142, %p143
    %p145 = scmp.ne.s32.totalorder %s134, %s135
    %p146 = scmp.eq.s32.totalorder %s16, 0
    %p147 = por %p145, %p146
    %p148 = scmp.ne.s32.totalorder %s134, %s135
    %p149 = scmp.eq.s32.totalorder %s17, 1
    %p150 = por %p148, %p149
    %p152 = scmp.ne.s32.totalorder %s135, %s151
    %p153 = scmp.eq.s32.totalorder %s17, 0
    %p154 = por %p152, %p153
    %p155 = scmp.le.s32.totalorder 1, %s11
    %p156 = scmp.lt.s32.totalorder %s11, 3
    %p157 = pnand %p155, %p156
    %p158 = pneg %p157
    // Predicated region
    $region9: #{neural_net_forward.1} parent=5 // pred_check
      _
    $region10: #{neural_net_forward.1} parent=5 // pred_check_branch
      %160 = sbr.rel (%p157) target = $region12
    $region11: #{neural_net_forward.1} parent=5 // pred_region
      %s161 = ssub.s32 %s11, 1
      // Predicated region
      $region13: #{neural_net_forward.1} parent=11 // pred_check
        %p162 = pneg %p58
      $region14: #{neural_net_forward.1} parent=11 // pred_check_branch
        %164 = sbr.rel (%p162) target = $region16
      $region15: #{neural_net_forward.1} parent=11 // pred_region
        _
      $region16: #{neural_net_forward.1} parent=11 // pred_fallthru
        _
      // Predicated region
      $region17: #{neural_net_forward.1} parent=11 // pred_check
        %p165 = pneg %p79
      $region18: #{neural_net_forward.1} parent=11 // pred_check_branch
        %167 = sbr.rel (%p165) target = $region20
      $region19: #{neural_net_forward.1} parent=11 // pred_region
        _
      $region20: #{neural_net_forward.1} parent=11 // pred_fallthru
        _
      // Predicated region
      $region21: #{neural_net_forward.1} parent=11 // pred_check
        %p168 = pneg %p100
      $region22: #{neural_net_forward.1} parent=11 // pred_check_branch
        %170 = sbr.rel (%p168) target = $region24
      $region23: #{neural_net_forward.1} parent=11 // pred_region
        _
      $region24: #{neural_net_forward.1} parent=11 // pred_fallthru
        _
      // Predicated region
      $region25: #{neural_net_forward.1} parent=11 // pred_check
        %p171 = pneg %p121
      $region26: #{neural_net_forward.1} parent=11 // pred_check_branch
        %173 = sbr.rel (%p171) target = $region28
      $region27: #{neural_net_forward.1} parent=11 // pred_region
        _
      $region28: #{neural_net_forward.1} parent=11 // pred_fallthru
        _
    $region12: #{neural_net_forward.1} parent=5 // pred_fallthru
      _
    %p174 = scmp.lt.s32.totalorder %s11, 2
    // Predicated region
    $region29: #{neural_net_forward.1} parent=5 // pred_check
      %p175 = pneg %p174
    $region30: #{neural_net_forward.1} parent=5 // pred_check_branch
      %177 = sbr.rel (%p175) target = $region32
    $region31: #{neural_net_forward.1} parent=5 // pred_region
      // Predicated region
      $region33: #{neural_net_forward.1} parent=31 // pred_check
        %p178 = pneg %p31
      $region34: #{neural_net_forward.1} parent=31 // pred_check_branch
        %180 = sbr.rel (%p178) target = $region36
      $region35: #{neural_net_forward.1} parent=31 // pred_region
        %s181 = smul.u32 16, %s11
        %p182 = scmp.lt.s32.totalorder %s181, 31
        %s183 = scalar_select %p182, %s181, 31
        %s184 = smul.addr %s183, 8
        %s185 = scalar_lea.vmem %s0, %s184
        %s186 = smul.u32 16, %s11
      $region36: #{neural_net_forward.1} parent=31 // pred_fallthru
        _
    $region32: #{neural_net_forward.1} parent=5 // pred_fallthru
      _
    %p187 = scmp.le.s32.totalorder 1, %s11
    %p188 = scmp.lt.s32.totalorder %s11, 3
    %p189 = pnand %p187, %p188
    %p190 = pneg %p189
    // Predicated region
    $region37: #{neural_net_forward.1} parent=5 // pred_check
      _
    $region38: #{neural_net_forward.1} parent=5 // pred_check_branch
      %192 = sbr.rel (%p189) target = $region40
    $region39: #{neural_net_forward.1} parent=5 // pred_region
      %s193 = ssub.s32 %s11, 1
      %s194 = smul.u32 16, %s16
      %p195 = scmp.lt.s32.totalorder %s194, 31
      %s196 = scalar_select %p195, %s194, 31
      %s197 = smul.addr %s196, 8
      %s198 = scalar_lea.vmem %s0, %s197
      %p199 = pneg %p37
      %p200 = pneg %p34
      %p201 = pneg %p58
      %p202 = pneg %p55
      %p203 = pneg %p79
      %p204 = pneg %p76
      %p205 = pneg %p100
      %p206 = pneg %p97
      %p207 = pneg %p121
      %p208 = pneg %p118
      %p209 = pneg %p147
      %p210 = pneg %p144
      %s211 = smul.u32 16, %s16
      %p212 = scmp.lt.s32.totalorder %s211, 31
      %s213 = scalar_select %p212, %s211, 31
      %s214 = smul.addr %s213, 8
      %s215 = scalar_lea.vmem %s5, %s214
      %s216 = smul.u32 16, %s16
      %p217 = scmp.lt.s32.totalorder %s216, 31
      %s218 = scalar_select %p217, %s216, 31
      %s219 = smul.addr %s218, 8
      %s220 = scalar_lea.vmem %s0, %s219
      %s221 = smul.u32 16, %s16
      %s222 = smul.u32 16, %s16
      %p223 = scmp.lt.s32.totalorder %s222, 31
      %s224 = scalar_select %p223, %s222, 31
      %s225 = smul.addr %s224, 8
      %s226 = scalar_lea.vmem %s5, %s225
      %s227 = smul.u32 16, %s16
      %v228 = vld [vmem:[%s220] sm:$0xff]
      %v229 = vld [vmem:[%s220 + $0x8] sm:$0xff]
      %v230 = vld [vmem:[%s220 + $0x10] sm:$0xff]
      %v231 = vld [vmem:[%s220 + $0x18] sm:$0xff]
      %v232 = vld [vmem:[%s220 + $0x20] sm:$0xff]
      %v233 = vld [vmem:[%s220 + $0x28] sm:$0xff]
      %v234 = vld [vmem:[%s220 + $0x30] sm:$0xff]
      %v235 = vld [vmem:[%s220 + $0x38] sm:$0xff]
      %v236 = vld [vmem:[%s220 + $0x40] sm:$0xff]
      %v237 = vld [vmem:[%s220 + $0x48] sm:$0xff]
      %v238 = vld [vmem:[%s220 + $0x50] sm:$0xff]
      %v239 = vld [vmem:[%s220 + $0x58] sm:$0xff]
      %v240 = vld [vmem:[%s220 + $0x60] sm:$0xff]
      %v241 = vld [vmem:[%s220 + $0x68] sm:$0xff]
      %v242 = vld [vmem:[%s220 + $0x70] sm:$0xff]
      %v243 = vld [vmem:[%s220 + $0x78] sm:$0xff]
      %v244 = vld [vmem:[%s1] sm:$0xf]
      %v245 = vld [vmem:[%s2] sm:$0x1]
      %v247 = vlaneseq
      %v248 = vshrl.u32 %v247, 7
      %v249 = vsub.s32 0, %v248
      %v250 = vrot.slane %v245, %v249
      %253 = vset.pattern.permute.xlu0 0
      %254 = vperm.xlu0 %253, %v228
      %v255 = vpop.permute.xlu0 %254
      %258 = vset.pattern.permute.xlu0 0
      %259 = vperm.xlu0 %258, %v229
      %v260 = vpop.permute.xlu0 %259
      %263 = vset.pattern.permute.xlu0 0
      %264 = vperm.xlu0 %263, %v230
      %v265 = vpop.permute.xlu0 %264
      %268 = vset.pattern.permute.xlu0 0
      %269 = vperm.xlu0 %268, %v231
      %v270 = vpop.permute.xlu0 %269
      %273 = vset.pattern.permute.xlu0 0
      %274 = vperm.xlu0 %273, %v232
      %v275 = vpop.permute.xlu0 %274
      %278 = vset.pattern.permute.xlu0 0
      %279 = vperm.xlu0 %278, %v233
      %v280 = vpop.permute.xlu0 %279
      %283 = vset.pattern.permute.xlu0 0
      %284 = vperm.xlu0 %283, %v234
      %v285 = vpop.permute.xlu0 %284
      %288 = vset.pattern.permute.xlu0 0
      %289 = vperm.xlu0 %288, %v235
      %v290 = vpop.permute.xlu0 %289
      %293 = vset.pattern.permute.xlu0 0
      %294 = vperm.xlu0 %293, %v236
      %v295 = vpop.permute.xlu0 %294
      %298 = vset.pattern.permute.xlu0 0
      %299 = vperm.xlu0 %298, %v237
      %v300 = vpop.permute.xlu0 %299
      %303 = vset.pattern.permute.xlu0 0
      %304 = vperm.xlu0 %303, %v238
      %v305 = vpop.permute.xlu0 %304
      %308 = vset.pattern.permute.xlu0 0
      %309 = vperm.xlu0 %308, %v239
      %v310 = vpop.permute.xlu0 %309
      %313 = vset.pattern.permute.xlu0 0
      %314 = vperm.xlu0 %313, %v240
      %v315 = vpop.permute.xlu0 %314
      %318 = vset.pattern.permute.xlu0 0
      %319 = vperm.xlu0 %318, %v241
      %v320 = vpop.permute.xlu0 %319
      %323 = vset.pattern.permute.xlu0 0
      %324 = vperm.xlu0 %323, %v242
      %v325 = vpop.permute.xlu0 %324
      %328 = vset.pattern.permute.xlu0 0
      %329 = vperm.xlu0 %328, %v243
      %v330 = vpop.permute.xlu0 %329
      %v332 = vlaneseq
      %v333 = vshrl.u32 %v332, 7
      %v334 = vsub.s32 0, %v333
      %v335 = vrot.slane %v244, %v334
      %v336 = vmul.f32 %v255, %v335
      %v337 = vmul.f32 %v260, %v335
      %v338 = vmul.f32 %v265, %v335
      %v339 = vmul.f32 %v270, %v335
      %v340 = vmul.f32 %v275, %v335
      %v341 = vmul.f32 %v280, %v335
      %v342 = vmul.f32 %v285, %v335
      %v343 = vmul.f32 %v290, %v335
      %v344 = vmul.f32 %v295, %v335
      %v345 = vmul.f32 %v300, %v335
      %v346 = vmul.f32 %v305, %v335
      %v347 = vmul.f32 %v310, %v335
      %v348 = vmul.f32 %v315, %v335
      %v349 = vmul.f32 %v320, %v335
      %v350 = vmul.f32 %v325, %v335
      %v351 = vmul.f32 %v330, %v335
      %v352 = vadd.f32 %v250, %v336
      %v353 = vadd.f32 %v250, %v337
      %v354 = vadd.f32 %v250, %v338
      %v355 = vadd.f32 %v250, %v339
      %v356 = vadd.f32 %v250, %v340
      %v357 = vadd.f32 %v250, %v341
      %v358 = vadd.f32 %v250, %v342
      %v359 = vadd.f32 %v250, %v343
      %v360 = vadd.f32 %v250, %v344
      %v361 = vadd.f32 %v250, %v345
      %v362 = vadd.f32 %v250, %v346
      %v363 = vadd.f32 %v250, %v347
      %v364 = vadd.f32 %v250, %v348
      %v365 = vadd.f32 %v250, %v349
      %v366 = vadd.f32 %v250, %v350
      %v367 = vadd.f32 %v250, %v351
      %368 = vset.pattern.permute.xlu0 1
      %369 = vperm.xlu0 %368, %v228
      %v370 = vpop.permute.xlu0 %369
      %372 = vset.pattern.permute.xlu0 1
      %373 = vperm.xlu0 %372, %v229
      %v374 = vpop.permute.xlu0 %373
      %376 = vset.pattern.permute.xlu0 1
      %377 = vperm.xlu0 %376, %v230
      %v378 = vpop.permute.xlu0 %377
      %380 = vset.pattern.permute.xlu0 1
      %381 = vperm.xlu0 %380, %v231
      %v382 = vpop.permute.xlu0 %381
      %384 = vset.pattern.permute.xlu0 1
      %385 = vperm.xlu0 %384, %v232
      %v386 = vpop.permute.xlu0 %385
      %388 = vset.pattern.permute.xlu0 1
      %389 = vperm.xlu0 %388, %v233
      %v390 = vpop.permute.xlu0 %389
      %392 = vset.pattern.permute.xlu0 1
      %393 = vperm.xlu0 %392, %v234
      %v394 = vpop.permute.xlu0 %393
      %396 = vset.pattern.permute.xlu0 1
      %397 = vperm.xlu0 %396, %v235
      %v398 = vpop.permute.xlu0 %397
      %400 = vset.pattern.permute.xlu0 1
      %401 = vperm.xlu0 %400, %v236
      %v402 = vpop.permute.xlu0 %401
      %404 = vset.pattern.permute.xlu0 1
      %405 = vperm.xlu0 %404, %v237
      %v406 = vpop.permute.xlu0 %405
      %408 = vset.pattern.permute.xlu0 1
      %409 = vperm.xlu0 %408, %v238
      %v410 = vpop.permute.xlu0 %409
      %412 = vset.pattern.permute.xlu0 1
      %413 = vperm.xlu0 %412, %v239
      %v414 = vpop.permute.xlu0 %413
      %416 = vset.pattern.permute.xlu0 1
      %417 = vperm.xlu0 %416, %v240
      %v418 = vpop.permute.xlu0 %417
      %420 = vset.pattern.permute.xlu0 1
      %421 = vperm.xlu0 %420, %v241
      %v422 = vpop.permute.xlu0 %421
      %424 = vset.pattern.permute.xlu0 1
      %425 = vperm.xlu0 %424, %v242
      %v426 = vpop.permute.xlu0 %425
      %428 = vset.pattern.permute.xlu0 1
      %429 = vperm.xlu0 %428, %v243
      %v430 = vpop.permute.xlu0 %429
      %v432 = vlaneseq
      %v433 = vshrl.u32 %v432, 7
      %v434 = vsub.s32 1, %v433
      %v435 = vrot.slane %v244, %v434
      %v436 = vmul.f32 %v370, %v435
      %v437 = vmul.f32 %v374, %v435
      %v438 = vmul.f32 %v378, %v435
      %v439 = vmul.f32 %v382, %v435
      %v440 = vmul.f32 %v386, %v435
      %v441 = vmul.f32 %v390, %v435
      %v442 = vmul.f32 %v394, %v435
      %v443 = vmul.f32 %v398, %v435
      %v444 = vmul.f32 %v402, %v435
      %v445 = vmul.f32 %v406, %v435
      %v446 = vmul.f32 %v410, %v435
      %v447 = vmul.f32 %v414, %v435
      %v448 = vmul.f32 %v418, %v435
      %v449 = vmul.f32 %v422, %v435
      %v450 = vmul.f32 %v426, %v435
      %v451 = vmul.f32 %v430, %v435
      %v452 = vadd.f32 %v352, %v436
      %v453 = vadd.f32 %v353, %v437
      %v454 = vadd.f32 %v354, %v438
      %v455 = vadd.f32 %v355, %v439
      %v456 = vadd.f32 %v356, %v440
      %v457 = vadd.f32 %v357, %v441
      %v458 = vadd.f32 %v358, %v442
      %v459 = vadd.f32 %v359, %v443
      %v460 = vadd.f32 %v360, %v444
      %v461 = vadd.f32 %v361, %v445
      %v462 = vadd.f32 %v362, %v446
      %v463 = vadd.f32 %v363, %v447
      %v464 = vadd.f32 %v364, %v448
      %v465 = vadd.f32 %v365, %v449
      %v466 = vadd.f32 %v366, %v450
      %v467 = vadd.f32 %v367, %v451
      %468 = vset.pattern.permute.xlu0 2
      %469 = vperm.xlu0 %468, %v228
      %v470 = vpop.permute.xlu0 %469
      %472 = vset.pattern.permute.xlu0 2
      %473 = vperm.xlu0 %472, %v229
      %v474 = vpop.permute.xlu0 %473
      %476 = vset.pattern.permute.xlu0 2
      %477 = vperm.xlu0 %476, %v230
      %v478 = vpop.permute.xlu0 %477
      %480 = vset.pattern.permute.xlu0 2
      %481 = vperm.xlu0 %480, %v231
      %v482 = vpop.permute.xlu0 %481
      %484 = vset.pattern.permute.xlu0 2
      %485 = vperm.xlu0 %484, %v232
      %v486 = vpop.permute.xlu0 %485
      %488 = vset.pattern.permute.xlu0 2
      %489 = vperm.xlu0 %488, %v233
      %v490 = vpop.permute.xlu0 %489
      %492 = vset.pattern.permute.xlu0 2
      %493 = vperm.xlu0 %492, %v234
      %v494 = vpop.permute.xlu0 %493
      %496 = vset.pattern.permute.xlu0 2
      %497 = vperm.xlu0 %496, %v235
      %v498 = vpop.permute.xlu0 %497
      %500 = vset.pattern.permute.xlu0 2
      %501 = vperm.xlu0 %500, %v236
      %v502 = vpop.permute.xlu0 %501
      %504 = vset.pattern.permute.xlu0 2
      %505 = vperm.xlu0 %504, %v237
      %v506 = vpop.permute.xlu0 %505
      %508 = vset.pattern.permute.xlu0 2
      %509 = vperm.xlu0 %508, %v238
      %v510 = vpop.permute.xlu0 %509
      %512 = vset.pattern.permute.xlu0 2
      %513 = vperm.xlu0 %512, %v239
      %v514 = vpop.permute.xlu0 %513
      %516 = vset.pattern.permute.xlu0 2
      %517 = vperm.xlu0 %516, %v240
      %v518 = vpop.permute.xlu0 %517
      %520 = vset.pattern.permute.xlu0 2
      %521 = vperm.xlu0 %520, %v241
      %v522 = vpop.permute.xlu0 %521
      %524 = vset.pattern.permute.xlu0 2
      %525 = vperm.xlu0 %524, %v242
      %v526 = vpop.permute.xlu0 %525
      %528 = vset.pattern.permute.xlu0 2
      %529 = vperm.xlu0 %528, %v243
      %v530 = vpop.permute.xlu0 %529
      %v532 = vlaneseq
      %v533 = vshrl.u32 %v532, 7
      %v534 = vsub.s32 2, %v533
      %v535 = vrot.slane %v244, %v534
      %v536 = vmul.f32 %v470, %v535
      %v537 = vmul.f32 %v474, %v535
      %v538 = vmul.f32 %v478, %v535
      %v539 = vmul.f32 %v482, %v535
      %v540 = vmul.f32 %v486, %v535
      %v541 = vmul.f32 %v490, %v535
      %v542 = vmul.f32 %v494, %v535
      %v543 = vmul.f32 %v498, %v535
      %v544 = vmul.f32 %v502, %v535
      %v545 = vmul.f32 %v506, %v535
      %v546 = vmul.f32 %v510, %v535
      %v547 = vmul.f32 %v514, %v535
      %v548 = vmul.f32 %v518, %v535
      %v549 = vmul.f32 %v522, %v535
      %v550 = vmul.f32 %v526, %v535
      %v551 = vmul.f32 %v530, %v535
      %v552 = vadd.f32 %v452, %v536
      %v553 = vadd.f32 %v453, %v537
      %v554 = vadd.f32 %v454, %v538
      %v555 = vadd.f32 %v455, %v539
      %v556 = vadd.f32 %v456, %v540
      %v557 = vadd.f32 %v457, %v541
      %v558 = vadd.f32 %v458, %v542
      %v559 = vadd.f32 %v459, %v543
      %v560 = vadd.f32 %v460, %v544
      %v561 = vadd.f32 %v461, %v545
      %v562 = vadd.f32 %v462, %v546
      %v563 = vadd.f32 %v463, %v547
      %v564 = vadd.f32 %v464, %v548
      %v565 = vadd.f32 %v465, %v549
      %v566 = vadd.f32 %v466, %v550
      %v567 = vadd.f32 %v467, %v551
      %568 = vset.pattern.permute.xlu0 3
      %569 = vperm.xlu0 %568, %v228
      %v570 = vpop.permute.xlu0 %569
      %572 = vset.pattern.permute.xlu0 3
      %573 = vperm.xlu0 %572, %v229
      %v574 = vpop.permute.xlu0 %573
      %576 = vset.pattern.permute.xlu0 3
      %577 = vperm.xlu0 %576, %v230
      %v578 = vpop.permute.xlu0 %577
      %580 = vset.pattern.permute.xlu0 3
      %581 = vperm.xlu0 %580, %v231
      %v582 = vpop.permute.xlu0 %581
      %584 = vset.pattern.permute.xlu0 3
      %585 = vperm.xlu0 %584, %v232
      %v586 = vpop.permute.xlu0 %585
      %588 = vset.pattern.permute.xlu0 3
      %589 = vperm.xlu0 %588, %v233
      %v590 = vpop.permute.xlu0 %589
      %592 = vset.pattern.permute.xlu0 3
      %593 = vperm.xlu0 %592, %v234
      %v594 = vpop.permute.xlu0 %593
      %596 = vset.pattern.permute.xlu0 3
      %597 = vperm.xlu0 %596, %v235
      %v598 = vpop.permute.xlu0 %597
      %600 = vset.pattern.permute.xlu0 3
      %601 = vperm.xlu0 %600, %v236
      %v602 = vpop.permute.xlu0 %601
      %604 = vset.pattern.permute.xlu0 3
      %605 = vperm.xlu0 %604, %v237
      %v606 = vpop.permute.xlu0 %605
      %608 = vset.pattern.permute.xlu0 3
      %609 = vperm.xlu0 %608, %v238
      %v610 = vpop.permute.xlu0 %609
      %612 = vset.pattern.permute.xlu0 3
      %613 = vperm.xlu0 %612, %v239
      %v614 = vpop.permute.xlu0 %613
      %616 = vset.pattern.permute.xlu0 3
      %617 = vperm.xlu0 %616, %v240
      %v618 = vpop.permute.xlu0 %617
      %620 = vset.pattern.permute.xlu0 3
      %621 = vperm.xlu0 %620, %v241
      %v622 = vpop.permute.xlu0 %621
      %624 = vset.pattern.permute.xlu0 3
      %625 = vperm.xlu0 %624, %v242
      %v626 = vpop.permute.xlu0 %625
      %628 = vset.pattern.permute.xlu0 3
      %629 = vperm.xlu0 %628, %v243
      %v630 = vpop.permute.xlu0 %629
      %v632 = vlaneseq
      %v633 = vshrl.u32 %v632, 7
      %v634 = vsub.s32 3, %v633
      %v635 = vrot.slane %v244, %v634
      %v636 = vmul.f32 %v570, %v635
      %v637 = vmul.f32 %v574, %v635
      %v638 = vmul.f32 %v578, %v635
      %v639 = vmul.f32 %v582, %v635
      %v640 = vmul.f32 %v586, %v635
      %v641 = vmul.f32 %v590, %v635
      %v642 = vmul.f32 %v594, %v635
      %v643 = vmul.f32 %v598, %v635
      %v644 = vmul.f32 %v602, %v635
      %v645 = vmul.f32 %v606, %v635
      %v646 = vmul.f32 %v610, %v635
      %v647 = vmul.f32 %v614, %v635
      %v648 = vmul.f32 %v618, %v635
      %v649 = vmul.f32 %v622, %v635
      %v650 = vmul.f32 %v626, %v635
      %v651 = vmul.f32 %v630, %v635
      %v652 = vadd.f32 %v552, %v636
      %v653 = vadd.f32 %v553, %v637
      %v654 = vadd.f32 %v554, %v638
      %v655 = vadd.f32 %v555, %v639
      %v656 = vadd.f32 %v556, %v640
      %v657 = vadd.f32 %v557, %v641
      %v658 = vadd.f32 %v558, %v642
      %v659 = vadd.f32 %v559, %v643
      %v660 = vadd.f32 %v560, %v644
      %v661 = vadd.f32 %v561, %v645
      %v662 = vadd.f32 %v562, %v646
      %v663 = vadd.f32 %v563, %v647
      %v664 = vadd.f32 %v564, %v648
      %v665 = vadd.f32 %v565, %v649
      %v666 = vadd.f32 %v566, %v650
      %v667 = vadd.f32 %v567, %v651
      %v668 = vmax.f32 %v652, 0.0
      %v669 = vmax.f32 %v653, 0.0
      %v670 = vmax.f32 %v654, 0.0
      %v671 = vmax.f32 %v655, 0.0
      %v672 = vmax.f32 %v656, 0.0
      %v673 = vmax.f32 %v657, 0.0
      %v674 = vmax.f32 %v658, 0.0
      %v675 = vmax.f32 %v659, 0.0
      %v676 = vmax.f32 %v660, 0.0
      %v677 = vmax.f32 %v661, 0.0
      %v678 = vmax.f32 %v662, 0.0
      %v679 = vmax.f32 %v663, 0.0
      %v680 = vmax.f32 %v664, 0.0
      %v681 = vmax.f32 %v665, 0.0
      %v682 = vmax.f32 %v666, 0.0
      %v683 = vmax.f32 %v667, 0.0
      %v684 = vld [vmem:[%s3] sm:$0xff]
      %v685 = vld [vmem:[%s3 + $0x8] sm:$0xff]
      %v686 = vld [vmem:[%s3 + $0x10] sm:$0xff]
      %v687 = vld [vmem:[%s3 + $0x18] sm:$0xff]
      %v688 = vld [vmem:[%s4] sm:$0x1]
      %v690 = vlaneseq
      %v691 = vshrl.u32 %v690, 7
      %v692 = vsub.s32 0, %v691
      %v693 = vrot.slane %v688, %v692
      %vm695 = vcmask 261120
      %v697 = vsel %vm695, %v668, 0
      %v700 = vsel %vm695, %v669, 0
      %v703 = vsel %vm695, %v670, 0
      %v706 = vsel %vm695, %v671, 0
      %v709 = vsel %vm695, %v672, 0
      %v712 = vsel %vm695, %v673, 0
      %v715 = vsel %vm695, %v674, 0
      %v718 = vsel %vm695, %v675, 0
      %v721 = vsel %vm695, %v676, 0
      %v724 = vsel %vm695, %v677, 0
      %v727 = vsel %vm695, %v678, 0
      %v730 = vsel %vm695, %v679, 0
      %v733 = vsel %vm695, %v680, 0
      %v736 = vsel %vm695, %v681, 0
      %v739 = vsel %vm695, %v682, 0
      %v742 = vsel %vm695, %v683, 0
      %744 = vmatprep.subr.mxu0 0.0
      %745 = vmatpush1.msra.mxu0 %v684
      %746 = vmatprep.subr.mxu0 0.0
      %747 = vmatpush1.msra.mxu0 %v685
      %748 = vmatprep.subr.mxu0 0.0
      %749 = vmatpush1.msra.mxu0 %v686
      %750 = vmatprep.subr.mxu0 0.0
      %751 = vmatpush1.msra.mxu0 %v687
      %752 = vmatprep.subr.mxu0 0.0
      %753 = vmatpush1.msra.mxu0 0.0
      %754 = vmatprep.subr.mxu0 0.0
      %755 = vmatpush1.msra.mxu0 0.0
      %756 = vmatprep.subr.mxu0 0.0
      %757 = vmatpush1.msra.mxu0 0.0
      %758 = vmatprep.subr.mxu0 0.0
      %759 = vmatpush1.msra.mxu0 0.0
      %760 = vmatprep.subr.mxu0 0.0
      %761 = vmatpush1.msra.mxu0 0.0
      %762 = vmatprep.subr.mxu0 0.0
      %763 = vmatpush1.msra.mxu0 0.0
      %764 = vmatprep.subr.mxu0 0.0
      %765 = vmatpush1.msra.mxu0 0.0
      %766 = vmatprep.subr.mxu0 0.0
      %767 = vmatpush1.msra.mxu0 0.0
      %768 = vmatprep.subr.mxu0 0.0
      %769 = vmatpush1.msra.mxu0 0.0
      %770 = vmatprep.subr.mxu0 0.0
      %771 = vmatpush1.msra.mxu0 0.0
      %772 = vmatprep.subr.mxu0 0.0
      %773 = vmatpush1.msra.mxu0 0.0
      %774 = vmatprep.subr.mxu0 0.0
      %775 = vmatpush1.msra.mxu0 0.0
      %776 = vmatprep.subr.mxu0 0.0
      %777 = vmatpush1.msra.mxu0 0.0
      %778 = vmatprep.subr.mxu0 0.0
      %779 = vmatpush1.msra.mxu0 0.0
      %780 = vmatprep.subr.mxu0 0.0
      %781 = vmatpush1.msra.mxu0 0.0
      %782 = vmatprep.subr.mxu0 0.0
      %783 = vmatpush1.msra.mxu0 0.0
      %784 = vmatprep.subr.mxu0 0.0
      %785 = vmatpush1.msra.mxu0 0.0
      %786 = vmatprep.subr.mxu0 0.0
      %787 = vmatpush1.msra.mxu0 0.0
      %788 = vmatprep.subr.mxu0 0.0
      %789 = vmatpush1.msra.mxu0 0.0
      %790 = vmatprep.subr.mxu0 0.0
      %791 = vmatpush1.msra.mxu0 0.0
      %792 = vmatprep.subr.mxu0 0.0
      %793 = vmatpush1.msra.mxu0 0.0
      %794 = vmatprep.subr.mxu0 0.0
      %795 = vmatpush1.msra.mxu0 0.0
      %796 = vmatprep.subr.mxu0 0.0
      %797 = vmatpush1.msra.mxu0 0.0
      %798 = vmatprep.subr.mxu0 0.0
      %799 = vmatpush1.msra.mxu0 0.0
      %800 = vmatprep.subr.mxu0 0.0
      %801 = vmatpush1.msra.mxu0 0.0
      %802 = vmatprep.subr.mxu0 0.0
      %803 = vmatpush1.msra.mxu0 0.0
      %804 = vmatprep.subr.mxu0 0.0
      %805 = vmatpush1.msra.mxu0 0.0
      %806 = vmatprep.subr.mxu0 0.0
      %807 = vmatpush1.msra.mxu0 0.0
      %808 = vmatprep.mubr.f32.mxu0 0.0
      %809 = vmatmul.mubr.f32.gmra.mrb[0].mxu0 %v697
      %v810 = vpop.f32.mrb[0].mxu0
      %v811 = vadd.f32 %v693, %v810
      %v812 = vpop.f32.mrb[0].mxu0
      %813 = vmatprep.mubr.f32.mxu0 0.0
      %814 = vmatmul.mubr.f32.gmra.mrb[0].mxu0 %v700
      %v815 = vpop.f32.mrb[0].mxu0
      %v816 = vadd.f32 %v693, %v815
      %v817 = vpop.f32.mrb[0].mxu0
      %818 = vmatprep.mubr.f32.mxu0 0.0
      %819 = vmatmul.mubr.f32.gmra.mrb[0].mxu0 %v703
      %v820 = vpop.f32.mrb[0].mxu0
      %v821 = vadd.f32 %v693, %v820
      %v822 = vpop.f32.mrb[0].mxu0
      %823 = vmatprep.mubr.f32.mxu0 0.0
      %824 = vmatmul.mubr.f32.gmra.mrb[0].mxu0 %v706
      %v825 = vpop.f32.mrb[0].mxu0
      %v826 = vadd.f32 %v693, %v825
      %v827 = vpop.f32.mrb[0].mxu0
      %828 = vmatprep.mubr.f32.mxu0 0.0
      %829 = vmatmul.mubr.f32.gmra.mrb[0].mxu0 %v709
      %v830 = vpop.f32.mrb[0].mxu0
      %v831 = vadd.f32 %v693, %v830
      %v832 = vpop.f32.mrb[0].mxu0
      %833 = vmatprep.mubr.f32.mxu0 0.0
      %834 = vmatmul.mubr.f32.gmra.mrb[0].mxu0 %v712
      %v835 = vpop.f32.mrb[0].mxu0
      %v836 = vadd.f32 %v693, %v835
      %v837 = vpop.f32.mrb[0].mxu0
      %838 = vmatprep.mubr.f32.mxu0 0.0
      %839 = vmatmul.mubr.f32.gmra.mrb[0].mxu0 %v715
      %v840 = vpop.f32.mrb[0].mxu0
      %v841 = vadd.f32 %v693, %v840
      %v842 = vpop.f32.mrb[0].mxu0
      %843 = vmatprep.mubr.f32.mxu0 0.0
      %844 = vmatmul.mubr.f32.gmra.mrb[0].mxu0 %v718
      %v845 = vpop.f32.mrb[0].mxu0
      %v846 = vadd.f32 %v693, %v845
      %v847 = vpop.f32.mrb[0].mxu0
      %848 = vmatprep.mubr.f32.mxu0 0.0
      %849 = vmatmul.mubr.f32.gmra.mrb[0].mxu0 %v721
      %v850 = vpop.f32.mrb[0].mxu0
      %v851 = vadd.f32 %v693, %v850
      %v852 = vpop.f32.mrb[0].mxu0
      %853 = vmatprep.mubr.f32.mxu0 0.0
      %854 = vmatmul.mubr.f32.gmra.mrb[0].mxu0 %v724
      %v855 = vpop.f32.mrb[0].mxu0
      %v856 = vadd.f32 %v693, %v855
      %v857 = vpop.f32.mrb[0].mxu0
      %858 = vmatprep.mubr.f32.mxu0 0.0
      %859 = vmatmul.mubr.f32.gmra.mrb[0].mxu0 %v727
      %v860 = vpop.f32.mrb[0].mxu0
      %v861 = vadd.f32 %v693, %v860
      %v862 = vpop.f32.mrb[0].mxu0
      %863 = vmatprep.mubr.f32.mxu0 0.0
      %864 = vmatmul.mubr.f32.gmra.mrb[0].mxu0 %v730
      %v865 = vpop.f32.mrb[0].mxu0
      %v866 = vadd.f32 %v693, %v865
      %v867 = vpop.f32.mrb[0].mxu0
      %868 = vmatprep.mubr.f32.mxu0 0.0
      %869 = vmatmul.mubr.f32.gmra.mrb[0].mxu0 %v733
      %v870 = vpop.f32.mrb[0].mxu0
      %v871 = vadd.f32 %v693, %v870
      %v872 = vpop.f32.mrb[0].mxu0
      %873 = vmatprep.mubr.f32.mxu0 0.0
      %874 = vmatmul.mubr.f32.gmra.mrb[0].mxu0 %v736
      %v875 = vpop.f32.mrb[0].mxu0
      %v876 = vadd.f32 %v693, %v875
      %v877 = vpop.f32.mrb[0].mxu0
      %878 = vmatprep.mubr.f32.mxu0 0.0
      %879 = vmatmul.mubr.f32.gmra.mrb[0].mxu0 %v739
      %v880 = vpop.f32.mrb[0].mxu0
      %v881 = vadd.f32 %v693, %v880
      %v882 = vpop.f32.mrb[0].mxu0
      %883 = vmatprep.mubr.f32.mxu0 0.0
      %884 = vmatmul.mubr.f32.gmra.mrb[0].mxu0 %v742
      %v885 = vpop.f32.mrb[0].mxu0
      %v886 = vadd.f32 %v693, %v885
      %v887 = vpop.f32.mrb[0].mxu0
      %888 = vdwg.mxu0
      %889 = vst [vmem:[%s226] sm:$0xff] %v811
      %890 = vst [vmem:[%s226 + $0x8] sm:$0xff] %v816
      %891 = vst [vmem:[%s226 + $0x10] sm:$0xff] %v821
      %892 = vst [vmem:[%s226 + $0x18] sm:$0xff] %v826
      %893 = vst [vmem:[%s226 + $0x20] sm:$0xff] %v831
      %894 = vst [vmem:[%s226 + $0x28] sm:$0xff] %v836
      %895 = vst [vmem:[%s226 + $0x30] sm:$0xff] %v841
      %896 = vst [vmem:[%s226 + $0x38] sm:$0xff] %v846
      %897 = vst [vmem:[%s226 + $0x40] sm:$0xff] %v851
      %898 = vst [vmem:[%s226 + $0x48] sm:$0xff] %v856
      %899 = vst [vmem:[%s226 + $0x50] sm:$0xff] %v861
      %900 = vst [vmem:[%s226 + $0x58] sm:$0xff] %v866
      %901 = vst [vmem:[%s226 + $0x60] sm:$0xff] %v871
      %902 = vst [vmem:[%s226 + $0x68] sm:$0xff] %v876
      %903 = vst [vmem:[%s226 + $0x70] sm:$0xff] %v881
      %904 = vst [vmem:[%s226 + $0x78] sm:$0xff] %v886
      %s905 = smul.u32 16, %s16
      %p906 = scmp.lt.s32.totalorder %s905, 31
      %s907 = scalar_select %p906, %s905, 31
      %s908 = smul.addr %s907, 8
      %s909 = scalar_lea.vmem %s5, %s908
      // Predicated region
      $region41: #{neural_net_forward.1} parent=39 // pred_check
        %p910 = pneg %p144
      $region42: #{neural_net_forward.1} parent=39 // pred_check_branch
        %912 = sbr.rel (%p910) target = $region44
      $region43: #{neural_net_forward.1} parent=39 // pred_region
        %s913 = smul.u32 16, %s16
      $region44: #{neural_net_forward.1} parent=39 // pred_fallthru
        _
    $region40: #{neural_net_forward.1} parent=5 // pred_fallthru
      _
    %p914 = scmp.le.s32.totalorder 2, %s11
    // Predicated region
    $region45: #{neural_net_forward.1} parent=5 // pred_check
      %p915 = pneg %p914
    $region46: #{neural_net_forward.1} parent=5 // pred_check_branch
      %917 = sbr.rel (%p915) target = $region48
    $region47: #{neural_net_forward.1} parent=5 // pred_region
      %s918 = ssub.s32 %s11, 2
      // Predicated region
      $region49: #{neural_net_forward.1} parent=47 // pred_check
        %p919 = pneg %p150
      $region50: #{neural_net_forward.1} parent=47 // pred_check_branch
        %921 = sbr.rel (%p919) target = $region52
      $region51: #{neural_net_forward.1} parent=47 // pred_region
        %s922 = smul.u32 16, %s17
        %p923 = scmp.lt.s32.totalorder %s922, 31
        %s924 = scalar_select %p923, %s922, 31
        %s925 = smul.addr %s924, 8
        %s926 = scalar_lea.vmem %s5, %s925
      $region52: #{neural_net_forward.1} parent=47 // pred_fallthru
        _
    $region48: #{neural_net_forward.1} parent=5 // pred_fallthru
      _
  $region6: #{neural_net_forward.1} parent=0 // loop_footer
    %s15 = sadd.s32 1, %s11
  $region7: #{neural_net_forward.1} parent=0 // loop_footer_branch
    %10 = sbr.rel target = $region3
  $region8: #{neural_net_forward.1} parent=0 // loop_exit
    _

</llo_original>
